<compile_context>
chip_gen: v5e
topology: v5e:2x2
jax: 0.10.0
libtpu: 0.0.40
codegen_flags: <defaults>
</compile_context>

<pallas_src>
import functools

import jax
import jax.numpy as jnp
from jax.experimental import pallas as pl
from jax.experimental.pallas import tpu as pltpu


def _round_up(x, m):
    return (x + m - 1) // m * m


def _cdiv(a, b):
    return -(-a // b)


_BATCH_TILE_CAP = 256   # rows per MXU pass (512 also fine on 128 MiB parts)
_CLASS_TILE_CAP = 256   # lane-dense output tile
_K_TILE_CAP = 2048      # single K block up to this D; above, tile & zero-pad K


def _batch_tiling(batch):
    # Balanced tiles: never ~double the work for a batch just above a tile cap
    # (e.g. B=264 -> 2 tiles of 136, not 256-tiles padded to 512).
    n_b = _cdiv(batch, _BATCH_TILE_CAP)
    return _round_up(_cdiv(batch, n_b), 8)


def _class_tiling(num_classes):
    return min(_round_up(num_classes, 128), _CLASS_TILE_CAP)


def _feature_tiling(input_dim):
    # Small/medium D: single K block, no padding needed anywhere on K.
    if input_dim <= _K_TILE_CAP:
        return input_dim, input_dim
    # Large D: balanced K tiles (multiple of 256), zero-padded.
    n_k = _cdiv(input_dim, _K_TILE_CAP)
    tk = _round_up(_cdiv(input_dim, n_k), 256)
    return tk, _round_up(input_dim, tk)


def _linear_kernel(x_ref, w_ref, b_ref, o_ref):
    # x_ref: (tile_b, tk) f32      w_ref: (tk, tn) compute dtype
    # b_ref: (1, tn) f32           o_ref: (tile_b, tn) VMEM-resident across k
    k = pl.program_id(2)

    @pl.when(k == 0)
    def _init():
        o_ref[...] = jnp.broadcast_to(b_ref[...], o_ref.shape).astype(o_ref.dtype)

    part = jnp.dot(
        x_ref[...].astype(w_ref.dtype),   # cast on the VPU, free under MXU work
        w_ref[...],
        preferred_element_type=jnp.float32,
    )
    o_ref[...] = (o_ref[...].astype(jnp.float32) + part).astype(o_ref.dtype)


def prepare_linear_probe_params(w_t, b, compute_dtype=jnp.bfloat16):
    """One-time weight/bias prep (off the hot path).

    w_t: (D, N) float32  -- PyTorch nn.Linear weight, transposed.
    b:   (N,)   float32
    K (rows) is zero-padded to the kernel's K tiling (correctness-critical);
    N (cols) is padded to a multiple of 128 (cheap, keeps DMA lane-dense).
    """
    D, N = w_t.shape
    _, Dp = _feature_tiling(D)
    Np = _round_up(N, 128)
    w_p = jnp.pad(w_t, ((0, Dp - D), (0, Np - N))).astype(compute_dtype)
    b_p = jnp.pad(b, (0, Np - N)).reshape(1, Np).astype(jnp.float32)
    return w_p, b_p


@functools.partial(
    jax.jit, static_argnames=("num_classes", "out_dtype", "force_pallas")
)
def linear_probe_forward(x, w_p, b_p, *, num_classes, out_dtype=jnp.float32,
                         force_pallas=False):
    """y = x @ W_t + b (PyTorch nn.Linear forward).

    x:   (B, D) float32 (cast to the compute dtype inside the kernel)
    w_p: (Dp, Np) padded weight from prepare_linear_probe_params
    b_p: (1, Np)  padded f32 bias
    Returns (B, num_classes) in out_dtype (f32 by default; bf16 is a v5e
    store-bandwidth option, only honored when D fits in a single K block).
    """
    B, D = x.shape
    Dp_w, Np_w = w_p.shape
    tk, Dp = _feature_tiling(D)
    assert Dp == Dp_w and Np_w >= _round_up(num_classes, 128), (
        "params were not prepared for this (input_dim, num_classes)")

    # Tiny-shape fast path: pallas_call fixed overhead dominates; let XLA fuse.
    if not force_pallas and B * D * num_classes <= 128 * 128 * 128:
        y = jnp.dot(x.astype(w_p.dtype), w_p[:D, :num_classes],
                    preferred_element_type=jnp.float32)
        return (y + b_p[:, :num_classes]).astype(out_dtype)

    tile_b = _batch_tiling(B)
    tn = _class_tiling(num_classes)
    n_b = _cdiv(B, tile_b)
    n_n = _cdiv(num_classes, tn)
    n_k = Dp // tk

    # Accumulating directly into the output block across K requires f32 there.
    if n_k > 1:
        out_dtype = jnp.float32

    # v7x has 2 TensorCores: make sure a "parallel" axis has >= 2 blocks.
    if n_b == 1 and n_n == 1 and tn > 128:
        tn = 128
        n_n = _cdiv(num_classes, tn)

    # Zero-pad x only along K (garbage there would corrupt the reduction);
    # batch/class edges rely on masked output stores instead of padding.
    if Dp != D:
        x = jnp.pad(x, ((0, 0), (0, Dp - D)))

    w_bytes = jnp.dtype(w_p.dtype).itemsize
    cost = pl.CostEstimate(
        flops=2 * B * D * num_classes,
        transcendentals=0,
        bytes_accessed=(
            n_n * B * Dp * 4                 # x re-read once per class tile (f32)
            + n_b * Dp * Np_w * w_bytes      # W re-read once per batch tile
            + Np_w * 4                       # bias
            + B * num_classes * jnp.dtype(out_dtype).itemsize  # output write
        ),
    )

    return pl.pallas_call(
        _linear_kernel,
        out_shape=jax.ShapeDtypeStruct((B, num_classes), out_dtype),
        grid_spec=pltpu.PrefetchScalarGridSpec(
            num_scalar_prefetch=0,
            grid=(n_b, n_n, n_k),
            in_specs=[
                pl.BlockSpec((tile_b, tk), lambda bi, ni, ki: (bi, ki)),  # x
                pl.BlockSpec((tk, tn), lambda bi, ni, ki: (ki, ni)),      # W
                pl.BlockSpec((1, tn), lambda bi, ni, ki: (0, ni)),        # bias
            ],
            out_specs=pl.BlockSpec((tile_b, tn), lambda bi, ni, ki: (bi, ni)),
        ),
        compiler_params=pltpu.CompilerParams(
            dimension_semantics=("parallel", "parallel", "arbitrary"),
        ),
        cost_estimate=cost,
    )(x, w_p, b_p)


def init_linear_probe_params(key, input_dim, num_classes=255):
    """Deterministic init mimicking nn.Linear (uniform +/- 1/sqrt(in_features))."""
    kw, kb = jax.random.split(key)
    bound = 1.0 / jnp.sqrt(jnp.float32(input_dim))
    # PyTorch weight is (out, in); we store its transpose (in, out).
    w_t = jax.random.uniform(kw, (input_dim, num_classes), jnp.float32,
                             minval=-bound, maxval=bound)
    b = jax.random.uniform(kb, (num_classes,), jnp.float32,
                           minval=-bound, maxval=bound)
    return w_t, b


if __name__ == "__main__":
    key = jax.random.PRNGKey(0)
    k_x, k_p = jax.random.split(key)

    batch = 8
    input_dim = 32
    num_classes = 255

    x = jax.random.normal(k_x, (batch, input_dim), jnp.float32)
    w_t, b = init_linear_probe_params(k_p, input_dim, num_classes)

    # One-time param prep (K/N padding + bf16 cast) outside the hot path.
    w_p, b_p = prepare_linear_probe_params(w_t, b)

    # Force the Pallas path (the default would route this tiny shape to XLA).
    y = linear_probe_forward(x, w_p, b_p, num_classes=num_classes,
                             force_pallas=True)
    y = jax.block_until_ready(y)
    assert y.shape == (batch, num_classes)

    # Reference with matching precision (bf16 inputs, f32 accumulation).
    xb = x.astype(jnp.bfloat16).astype(jnp.float32)
    wb = w_t.astype(jnp.bfloat16).astype(jnp.float32)
    y_ref = xb @ wb + b
    assert jnp.allclose(y, y_ref, atol=2e-2, rtol=2e-2)

    # Loose sanity check against exact f32 nn.Linear.
    y_f32 = x @ w_t + b
    assert jnp.allclose(y, y_f32, atol=1e-1, rtol=1e-1)

    # Tiny-shape fast path (default dispatch) must agree with the Pallas path.
    y_fast = jax.block_until_ready(
        linear_probe_forward(x, w_p, b_p, num_classes=num_classes))
    assert y_fast.shape == (batch, num_classes)
    assert jnp.allclose(y, y_fast, atol=2e-2, rtol=2e-2)

    print("KERNEL_OK")
</pallas_src>

<mosaic_0001>
module attributes {stable_mosaic.version = 11 : i64} {
  func.func @_linear_kernel(%arg0: i32, %arg1: i32, %arg2: i32, %arg3: memref<8x32xf32, #tpu.memory_space<vmem>>, %arg4: memref<32x128xbf16, #tpu.memory_space<vmem>>, %arg5: memref<1x128xf32, #tpu.memory_space<vmem>>, %arg6: memref<8x128xf32, #tpu.memory_space<vmem>>) attributes {dimension_semantics = [#tpu.dimension_semantics<parallel>, #tpu.dimension_semantics<parallel>, #tpu.dimension_semantics<arbitrary>], iteration_bounds = array<i64: 1, 2, 1>, scalar_prefetch = 0 : i64, scratch_operands = 0 : i64, tpu.core_type = #tpu.core_type<tc>, window_params = [{transform_indices = @transform_0, window_bounds = array<i64: 8, 32>}, {transform_indices = @transform_1, window_bounds = array<i64: 32, 128>}, {transform_indices = @transform_2, window_bounds = array<i64: 1, 128>}, {transform_indices = @transform_3, window_bounds = array<i64: 8, 128>}]} {
    %c0_i32 = arith.constant 0 : i32
    %0 = arith.cmpi eq, %arg2, %c0_i32 : i32
    %1 = arith.extui %0 : i1 to i32
    %c0_i32_0 = arith.constant 0 : i32
    %2 = arith.cmpi ne, %1, %c0_i32_0 : i32
    scf.if %2 {
      %c0_8 = arith.constant 0 : index
      %c0_9 = arith.constant 0 : index
      %10 = vector.load %arg5[%c0_8, %c0_9] : memref<1x128xf32, #tpu.memory_space<vmem>>, vector<1x128xf32>
      %11 = vector.shape_cast %10 : vector<1x128xf32> to vector<1x128xf32>
      %12 = vector.broadcast %11 : vector<1x128xf32> to vector<8x128xf32>
      %c0_10 = arith.constant 0 : index
      %c0_11 = arith.constant 0 : index
      %13 = vector.load %arg6[%c0_10, %c0_11] : memref<8x128xf32, #tpu.memory_space<vmem>>, vector<8x128xf32>
      tpu.vector_store %arg6[%c0_10, %c0_11], %12 {strides = array<i32>} : memref<8x128xf32, #tpu.memory_space<vmem>>, vector<8x128xf32>,
    } else {
    }
    %c0 = arith.constant 0 : index
    %c0_1 = arith.constant 0 : index
    %3 = vector.load %arg3[%c0, %c0_1] : memref<8x32xf32, #tpu.memory_space<vmem>>, vector<8x32xf32>
    %4 = arith.truncf %3 : vector<8x32xf32> to vector<8x32xbf16>
    %c0_2 = arith.constant 0 : index
    %c0_3 = arith.constant 0 : index
    %5 = vector.load %arg4[%c0_2, %c0_3] : memref<32x128xbf16, #tpu.memory_space<vmem>>, vector<32x128xbf16>
    %cst = arith.constant dense<0.000000e+00> : vector<8x128xf32>
    %6 = tpu.matmul %4, %5, %cst {dimension_numbers = #tpu.dot_dimension_numbers<[1], [0], [0], [1], [0, 0, 1, 1], [], []>} : vector<8x32xbf16>, vector<32x128xbf16>, vector<8x128xf32> -> vector<8x128xf32>
    %c0_4 = arith.constant 0 : index
    %c0_5 = arith.constant 0 : index
    %7 = vector.load %arg6[%c0_4, %c0_5] : memref<8x128xf32, #tpu.memory_space<vmem>>, vector<8x128xf32>
    %8 = arith.addf %7, %6 : vector<8x128xf32>
    %c0_6 = arith.constant 0 : index
    %c0_7 = arith.constant 0 : index
    %9 = vector.load %arg6[%c0_6, %c0_7] : memref<8x128xf32, #tpu.memory_space<vmem>>, vector<8x128xf32>
    tpu.vector_store %arg6[%c0_6, %c0_7], %8 {strides = array<i32>} : memref<8x128xf32, #tpu.memory_space<vmem>>, vector<8x128xf32>,
    return
  }
  func.func @transform_0(%arg0: i32, %arg1: i32, %arg2: i32) -> (i32, i32) {
    %c0_i32 = arith.constant 0 : i32
    return %arg0, %arg2 : i32, i32
  }
  func.func @transform_1(%arg0: i32, %arg1: i32, %arg2: i32) -> (i32, i32) {
    %c0_i32 = arith.constant 0 : i32
    return %arg2, %arg1 : i32, i32
  }
  func.func @transform_2(%arg0: i32, %arg1: i32, %arg2: i32) -> (i32, i32) {
    %c0_i32 = arith.constant 0 : i32
    %c0_i32_0 = arith.constant 0 : i32
    return %c0_i32, %arg1 : i32, i32
  }
  func.func @transform_3(%arg0: i32, %arg1: i32, %arg2: i32) -> (i32, i32) {
    %c0_i32 = arith.constant 0 : i32
    return %arg0, %arg1 : i32, i32
  }
}

</mosaic_0001>

<llo_original>
// kernel: linear_probe_forward.1
$region0: #{linear_probe_forward.1}
  #allocation0 [shape = 'u32[]', space=smem, size = 0x4, offset = 0x4, fixed_abs, tag = 'smem constant byte address 0x4 - core index']
  #allocation1 [shape = 'u32[72,128]{1,0:T(1,128)}', space=vmem, size = 0x9000, scoped, tag = 'internal scratch']
  %s0 = inlined_call_operand.hbm [shape: f32[8,32], index: 0, kind: input, shape index: {}]
  %s1 = inlined_call_operand.hbm [shape: bf16[32,256], index: 1, kind: input, shape index: {}]
  %s2 = inlined_call_operand.hbm [shape: f32[1,256], index: 2, kind: input, shape index: {}]
  %s3 = inlined_call_operand.hbm [shape: f32[8,255], index: 3, kind: output, shape index: {}]
  %s4 = sld [smem:[#allocation0]]
  $region61: #{linear_probe_forward.1} parent=0
    _
  %s6 = ssub.s32 1, %s4
  %s7 = scalar_select 0, %s6, %s4
  $region1: #{linear_probe_forward.1} parent=0
    #allocation2 [shape = 'u8[4096]{0}', space=vmem, size = 0x1000, scoped, tag = 'input window, operand 0, single buffered']
    #allocation3 [shape = 's32[2]{0}', space=sflag, size = 0x8, scoped, tag = 'scoped memory for linear_probe_forward.1']
    #allocation4 [shape = 's32[2]{0}', space=sflag, size = 0x8, scoped, tag = 'scoped memory for linear_probe_forward.1']
    #allocation5 [shape = 'u8[16384]{0}', space=vmem, size = 0x4000, scoped, tag = 'input window, operand 1']
    #allocation6 [shape = 's32[2]{0}', space=sflag, size = 0x8, scoped, tag = 'scoped memory for linear_probe_forward.1']
    #allocation7 [shape = 'u8[1024]{0}', space=vmem, size = 0x400, scoped, tag = 'input window, operand 2']
    #allocation8 [shape = 'u8[8192]{0}', space=vmem, size = 0x2000, scoped, tag = 'output window, operand 0']
    %8 = vsyncpa [#allocation3], 0
    %9 = vsyncpa [#allocation6], 0
    %s10 = scalar_lea.sflag [#allocation6], 1
    %11 = vsyncpa %s10, 0
    %12 = vsyncpa [#allocation4], 0
    %s13 = scalar_lea.sflag [#allocation4], 1
    %14 = vsyncpa %s13, 0
    loop: start=0, step=1, limit=4
    $region2: #{linear_probe_forward.1} parent=1 // loop_pre_header
      _
    $region3: #{linear_probe_forward.1} parent=1 // loop_header
      %s16 = sphi 0, %s20
      %p17 = scmp.ge.s32.totalorder %s16, 4
      %s23 = sphi 0, %s42
      %s24 = sphi 0, %s38
      %s25 = sphi 0, %s34
      %s26 = sphi 0, %s23
      %s27 = sphi 0, %s24
      %s28 = sphi 0, %s25
      %s29 = sphi 0, %s26
      %s30 = sphi 0, %s27
      %s31 = sphi 0, %s28
      %s47 = sphi 0, %s49
      %s50 = sphi 0, %s47
      %s51 = sphi 0, %s50
      %s67 = sphi 0, %s51
      %s75 = sphi 0, %s77
      %s78 = sphi 0, %s75
      %s79 = sphi 0, %s78
      %s95 = sphi 0, %s79
      %s101 = sphi 0, %s103
      %s104 = sphi 0, %s101
      %s105 = sphi 0, %s104
      %s121 = sphi 0, %s105
      %s129 = sphi 0, %s131
      %s132 = sphi 0, %s129
      %s133 = sphi 0, %s132
      %s149 = sphi 0, %s133
    $region4: #{linear_probe_forward.1} parent=1 // loop_header_branch
      %19 = sbr.rel (%p17) target = $region8
    $region5: #{linear_probe_forward.1} parent=1 // loop_body
      %s21 = ssub.s32 %s16, 1
      %s22 = ssub.s32 %s16, 2
      %s32 = sadd.s32 1, %s25
      %p33 = scmp.ge.s32.totalorder %s32, 1
      %s34 = scalar_select %p33, 0, %s32
      %s35 = sadd.s32 1, %s24
      %s36 = scalar_select %p33, %s35, %s24
      %p37 = scmp.ge.s32.totalorder %s36, 2
      %s38 = scalar_select %p37, 0, %s36
      %s39 = sadd.s32 1, %s23
      %s40 = scalar_select %p37, %s39, %s23
      %p41 = scmp.ge.s32.totalorder %s40, 1
      %s42 = scalar_select %p41, 0, %s40
      %s43 = ssub.s32 %s23, %s42
      %s44 = ssub.s32 %s25, %s34
      %s45 = sor.u32 %s43, %s44
      %p46 = scmp.eq.s32.totalorder %s45, 0
      %s48 = sadd.s32 %s47, 1
      %s49 = scalar_select %p46, %s47, %s48
      %p52 = pneg %p46
      %p53 = scmp.eq.s32.totalorder %s16, 1
      %p54 = por %p52, %p53
      %p55 = scmp.ne.s32.totalorder %s47, %s50
      %p56 = scmp.eq.s32.totalorder %s16, 0
      %p57 = por %p55, %p56
      %p58 = scmp.ne.s32.totalorder %s47, %s50
      %p59 = scmp.eq.s32.totalorder %s21, 1
      %p60 = por %p58, %p59
      %p61 = scmp.ne.s32.totalorder %s50, %s51
      %p62 = scmp.eq.s32.totalorder %s21, 0
      %p63 = por %p61, %p62
      %p64 = scmp.ne.s32.totalorder %s50, %s51
      %p65 = scmp.eq.s32.totalorder %s22, 1
      %p66 = por %p64, %p65
      %p68 = scmp.ne.s32.totalorder %s51, %s67
      %p69 = scmp.eq.s32.totalorder %s22, 0
      %p70 = por %p68, %p69
      %s71 = ssub.s32 %s25, %s34
      %s72 = ssub.s32 %s24, %s38
      %s73 = sor.u32 %s71, %s72
      %p74 = scmp.eq.s32.totalorder %s73, 0
      %s76 = sadd.s32 %s75, 1
      %s77 = scalar_select %p74, %s75, %s76
      %p80 = pneg %p74
      %p81 = scmp.eq.s32.totalorder %s16, 1
      %p82 = por %p80, %p81
      %p83 = scmp.ne.s32.totalorder %s75, %s78
      %p84 = scmp.eq.s32.totalorder %s16, 0
      %p85 = por %p83, %p84
      %p86 = scmp.ne.s32.totalorder %s75, %s78
      %p87 = scmp.eq.s32.totalorder %s21, 1
      %p88 = por %p86, %p87
      %p89 = scmp.ne.s32.totalorder %s78, %s79
      %p90 = scmp.eq.s32.totalorder %s21, 0
      %p91 = por %p89, %p90
      %p92 = scmp.ne.s32.totalorder %s78, %s79
      %p93 = scmp.eq.s32.totalorder %s22, 1
      %p94 = por %p92, %p93
      %p96 = scmp.ne.s32.totalorder %s79, %s95
      %p97 = scmp.eq.s32.totalorder %s22, 0
      %p98 = por %p96, %p97
      %s99 = ssub.s32 %s24, %s38
      %p100 = scmp.eq.s32.totalorder %s99, 0
      %s102 = sadd.s32 %s101, 1
      %s103 = scalar_select %p100, %s101, %s102
      %p106 = pneg %p100
      %p107 = scmp.eq.s32.totalorder %s16, 1
      %p108 = por %p106, %p107
      %p109 = scmp.ne.s32.totalorder %s101, %s104
      %p110 = scmp.eq.s32.totalorder %s16, 0
      %p111 = por %p109, %p110
      %p112 = scmp.ne.s32.totalorder %s101, %s104
      %p113 = scmp.eq.s32.totalorder %s21, 1
      %p114 = por %p112, %p113
      %p115 = scmp.ne.s32.totalorder %s104, %s105
      %p116 = scmp.eq.s32.totalorder %s21, 0
      %p117 = por %p115, %p116
      %p118 = scmp.ne.s32.totalorder %s104, %s105
      %p119 = scmp.eq.s32.totalorder %s22, 1
      %p120 = por %p118, %p119
      %p122 = scmp.ne.s32.totalorder %s105, %s121
      %p123 = scmp.eq.s32.totalorder %s22, 0
      %p124 = por %p122, %p123
      %s125 = ssub.s32 %s23, %s42
      %s126 = ssub.s32 %s24, %s38
      %s127 = sor.u32 %s125, %s126
      %p128 = scmp.eq.s32.totalorder %s127, 0
      %s130 = sadd.s32 %s129, 1
      %s131 = scalar_select %p128, %s129, %s130
      %p134 = pneg %p128
      %p135 = scmp.eq.s32.totalorder %s16, 1
      %p136 = por %p134, %p135
      %p137 = scmp.ne.s32.totalorder %s129, %s132
      %p138 = scmp.eq.s32.totalorder %s16, 0
      %p139 = por %p137, %p138
      %p140 = scmp.ne.s32.totalorder %s129, %s132
      %p141 = scmp.eq.s32.totalorder %s21, 1
      %p142 = por %p140, %p141
      %p143 = scmp.ne.s32.totalorder %s132, %s133
      %p144 = scmp.eq.s32.totalorder %s21, 0
      %p145 = por %p143, %p144
      %p146 = scmp.ne.s32.totalorder %s132, %s133
      %p147 = scmp.eq.s32.totalorder %s22, 1
      %p148 = por %p146, %p147
      %p150 = scmp.ne.s32.totalorder %s133, %s149
      %p151 = scmp.eq.s32.totalorder %s22, 0
      %p152 = por %p150, %p151
      %p153 = scmp.le.s32.totalorder 1, %s16
      %p154 = scmp.lt.s32.totalorder %s16, 3
      %p155 = pnand %p153, %p154
      %p156 = pneg %p155
      // Predicated region
      $region9: #{linear_probe_forward.1} parent=5 // pred_check
        _
      $region10: #{linear_probe_forward.1} parent=5 // pred_check_branch
        %158 = sbr.rel (%p155) target = $region12
      $region11: #{linear_probe_forward.1} parent=5 // pred_region
        %s159 = ssub.s32 %s16, 1
        // Predicated region
        $region13: #{linear_probe_forward.1} parent=11 // pred_check
          %p160 = pneg %p63
        $region14: #{linear_probe_forward.1} parent=11 // pred_check_branch
          %162 = sbr.rel (%p160) target = $region16
        $region15: #{linear_probe_forward.1} parent=11 // pred_region
          %164 = vsyncadd [#allocation3], 0
          %s165 = sadd.s32 %s28, %s26
          %s166 = smul.addr %s165, 8
          %s167 = scalar_lea.hbm %s0, %s166
          %s169 = sshll.u32 %s167, 4
          %s170 = int_to_ptr.hbm [resolvable:$true] %s169
          %s171 = sshll.u32 [#allocation2], 4
          %s172 = int_to_ptr.vmem [resolvable:$true] %s171
          %174 = dma.hbm_to_vmem [thread:$0]  %s170, 128, %s172, [#allocation3]
        $region16: #{linear_probe_forward.1} parent=11 // pred_fallthru
          _
      $region12: #{linear_probe_forward.1} parent=5 // pred_fallthru
        _
      %p175 = scmp.lt.s32.totalorder %s16, 2
      // Predicated region
      $region17: #{linear_probe_forward.1} parent=5 // pred_check
        %p176 = pneg %p175
      $region18: #{linear_probe_forward.1} parent=5 // pred_check_branch
        %178 = sbr.rel (%p176) target = $region20
      $region19: #{linear_probe_forward.1} parent=5 // pred_region
        // Predicated region
        $region21: #{linear_probe_forward.1} parent=19 // pred_check
          %p179 = pneg %p85
        $region22: #{linear_probe_forward.1} parent=19 // pred_check_branch
          %181 = sbr.rel (%p179) target = $region24
        $region23: #{linear_probe_forward.1} parent=19 // pred_region
          %s182 = sand.u32 %s16, 1
          %s183 = scalar_lea.sflag [#allocation6], %s182
          %s184 = sand.u32 %s75, 1
          %s185 = smul.addr %s184, 16
          %s186 = scalar_lea.vmem [#allocation5], %s185
          %s187 = smul.u32 4, %s25
          %189 = vsyncadd %s183, 0
          %s190 = smul.addr %s187, 2
          %s191 = sadd.s32 %s24, %s190
          %s192 = smul.addr %s191, 4
          %s193 = scalar_lea.hbm %s1, %s192
          %s194 = sshll.u32 %s193, 4
          %s195 = int_to_ptr.hbm [resolvable:$true] %s194
          %s196 = sshll.u32 %s186, 4
          %s197 = int_to_ptr.vmem [resolvable:$true] %s196
          %202 = dma.hbm_to_vmem [thread:$0]  %s195, 256, %s197, %s183, 128, 64, 4
        $region24: #{linear_probe_forward.1} parent=19 // pred_fallthru
          _
        // Predicated region
        $region25: #{linear_probe_forward.1} parent=19 // pred_check
          %p203 = pneg %p111
        $region26: #{linear_probe_forward.1} parent=19 // pred_check_branch
          %205 = sbr.rel (%p203) target = $region28
        $region27: #{linear_probe_forward.1} parent=19 // pred_region
          %s206 = sand.u32 %s16, 1
          %s207 = scalar_lea.sflag [#allocation6], %s206
          %s208 = sand.u32 %s101, 1
          %s209 = scalar_lea.vmem [#allocation7], %s208
          %211 = vsyncadd %s207, 0
          %s212 = scalar_lea.hbm %s2, %s24
          %s214 = sshll.u32 %s212, 4
          %s215 = int_to_ptr.hbm [resolvable:$true] %s214
          %s216 = sshll.u32 %s209, 4
          %s217 = int_to_ptr.vmem [resolvable:$true] %s216
          %219 = dma.hbm_to_vmem [thread:$0]  %s215, 16, %s217, %s207
        $region28: #{linear_probe_forward.1} parent=19 // pred_fallthru
          _
      $region20: #{linear_probe_forward.1} parent=5 // pred_fallthru
        _
      %p220 = scmp.le.s32.totalorder 1, %s16
      %p221 = scmp.lt.s32.totalorder %s16, 3
      %p222 = pnand %p220, %p221
      %p223 = pneg %p222
      // Predicated region
      $region29: #{linear_probe_forward.1} parent=5 // pred_check
        _
      $region30: #{linear_probe_forward.1} parent=5 // pred_check_branch
        %225 = sbr.rel (%p222) target = $region32
      $region31: #{linear_probe_forward.1} parent=5 // pred_region
        %s226 = ssub.s32 %s16, 1
        // Predicated region
        $region33: #{linear_probe_forward.1} parent=31 // pred_check
          %p227 = pneg %p63
        $region34: #{linear_probe_forward.1} parent=31 // pred_check_branch
          %229 = sbr.rel (%p227) target = $region36
        $region35: #{linear_probe_forward.1} parent=31 // pred_region
          %231 = dma.done [#allocation3], 128
        $region36: #{linear_probe_forward.1} parent=31 // pred_fallthru
          _
        %s232 = sand.u32 %s21, 1
        %s233 = scalar_lea.sflag [#allocation6], %s232
        %s234 = sand.u32 %s78, 1
        %s235 = smul.addr %s234, 16
        %s236 = scalar_lea.vmem [#allocation5], %s235
        // Predicated region
        $region37: #{linear_probe_forward.1} parent=31 // pred_check
          %p237 = pneg %p91
        $region38: #{linear_probe_forward.1} parent=31 // pred_check_branch
          %239 = sbr.rel (%p237) target = $region40
        $region39: #{linear_probe_forward.1} parent=31 // pred_region
          %241 = dma.done %s233, 256
        $region40: #{linear_probe_forward.1} parent=31 // pred_fallthru
          _
        %s242 = sand.u32 %s21, 1
        %s243 = scalar_lea.sflag [#allocation6], %s242
        %s244 = sand.u32 %s104, 1
        %s245 = scalar_lea.vmem [#allocation7], %s244
        // Predicated region
        $region41: #{linear_probe_forward.1} parent=31 // pred_check
          %p246 = pneg %p117
        $region42: #{linear_probe_forward.1} parent=31 // pred_check_branch
          %248 = sbr.rel (%p246) target = $region44
        $region43: #{linear_probe_forward.1} parent=31 // pred_region
          %250 = dma.done %s243, 16
        $region44: #{linear_probe_forward.1} parent=31 // pred_fallthru
          _
        %p251 = pneg %p63
        %p252 = pneg %p60
        %s253 = sand.u32 %s21, 1
        %s254 = scalar_lea.sflag [#allocation6], %s253
        %s255 = sand.u32 %s78, 1
        %s256 = smul.addr %s255, 16
        %s257 = scalar_lea.vmem [#allocation5], %s256
        %p258 = pneg %p91
        %p259 = pneg %p88
        %s260 = sand.u32 %s21, 1
        %s261 = scalar_lea.sflag [#allocation6], %s260
        %s262 = sand.u32 %s104, 1
        %s263 = scalar_lea.vmem [#allocation7], %s262
        %p264 = pneg %p117
        %p265 = pneg %p114
        %p266 = pneg %p145
        %p267 = pneg %p142
        %s268 = sand.u32 %s132, 1
        %s269 = scalar_lea.sflag [#allocation4], %s268
        %s270 = sand.u32 %s132, 1
        %s271 = smul.addr %s270, 8
        %s272 = scalar_lea.vmem [#allocation8], %s271
        %s273 = smul.u32 4, %s28
        %p275 = scmp.eq.s32.totalorder %s28, 0
        // Predicated region
        $region45: #{linear_probe_forward.1} parent=31 // pred_check
          %p276 = pneg %p275
        $region46: #{linear_probe_forward.1} parent=31 // pred_check_branch
          %278 = sbr.rel (%p276) target = $region48
        $region47: #{linear_probe_forward.1} parent=31 // pred_region
          %v279 = vld [vmem:[%s245] sm:$0x1]
          %v281 = vperm.slane %v279, 0
          %283 = vst [vmem:[%s272] sm:$0xff] %v281
        $region48: #{linear_probe_forward.1} parent=31 // pred_fallthru
          _
        %v284 = vld [vmem:[#allocation2] sm:$0xff]
        %v285 = vpack.c.bf16 %v284, %v284
        %v286 = vld [vmem:[%s236] sm:$0xf]
        %v287 = vld [vmem:[%s236 + $0x4] sm:$0xf]
        %v288 = vld [vmem:[%s236 + $0x8] sm:$0xf]
        %v289 = vld [vmem:[%s236 + $0xc] sm:$0xf]
        %v294 = vunpack.c.l.b16 %v286
        %v295 = vunpack.c.l.b16 %v287
        %v296 = vunpack.c.l.b16 %v288
        %v297 = vunpack.c.l.b16 %v289
        %v298 = vpack.c.b16 %v295, %v294
        %v299 = vpack.c.b16 %v297, %v296
        %vm302 = vcmask 261120
        %v304 = vsel %vm302, %v285, 0
        %306 = vmatpush.bf16.msra.mxu0 0
        %307 = vmatpush.bf16.msra.mxu0 0
        %308 = vmatpush.bf16.msra.mxu0 0
        %309 = vmatpush.bf16.msra.mxu0 0
        %310 = vmatpush.bf16.msra.mxu0 0
        %311 = vmatpush.bf16.msra.mxu0 0
        %312 = vmatpush.bf16.msra.mxu0 %v299
        %313 = vmatpush.bf16.msra.mxu0 %v298
        %314 = vmatmul.bf16.gmra.mxu0 %v304
        %v315 = vpop.f32.mrf.mxu0
        %v316 = vadd.f32 0.0, %v315
        %v317 = vpop.f32.mrf.mxu0
        %318 = vdwg.mxu0
        %v319 = vld [vmem:[%s272] sm:$0xff]
        %v320 = vadd.f32 %v319, %v316
        %321 = vst [vmem:[%s272] sm:$0xff] %v320
        %s322 = sand.u32 %s132, 1
        %s323 = scalar_lea.sflag [#allocation4], %s322
        %s324 = sand.u32 %s132, 1
        %s325 = smul.addr %s324, 8
        %s326 = scalar_lea.vmem [#allocation8], %s325
        // Predicated region
        $region49: #{linear_probe_forward.1} parent=31 // pred_check
          %p327 = pneg %p142
        $region50: #{linear_probe_forward.1} parent=31 // pred_check_branch
          %329 = sbr.rel (%p327) target = $region52
        $region51: #{linear_probe_forward.1} parent=31 // pred_region
          %331 = vsyncadd %s323, 0
          %s332 = smul.addr %s26, 2
          %s333 = sadd.s32 %s27, %s332
          %s334 = smul.addr %s333, 8
          %s335 = scalar_lea.hbm %s3, %s334
          %s337 = sshll.u32 %s326, 4
          %s338 = int_to_ptr.vmem [resolvable:$true] %s337
          %s339 = sshll.u32 %s335, 4
          %s340 = int_to_ptr.hbm [resolvable:$true] %s339
          %342 = dma.vmem_to_hbm [thread:$0]  %s338, 128, %s340, %s323
        $region52: #{linear_probe_forward.1} parent=31 // pred_fallthru
          _
      $region32: #{linear_probe_forward.1} parent=5 // pred_fallthru
        _
      %p343 = scmp.le.s32.totalorder 2, %s16
      // Predicated region
      $region53: #{linear_probe_forward.1} parent=5 // pred_check
        %p344 = pneg %p343
      $region54: #{linear_probe_forward.1} parent=5 // pred_check_branch
        %346 = sbr.rel (%p344) target = $region56
      $region55: #{linear_probe_forward.1} parent=5 // pred_region
        %s347 = ssub.s32 %s16, 2
        // Predicated region
        $region57: #{linear_probe_forward.1} parent=55 // pred_check
          %p348 = pneg %p148
        $region58: #{linear_probe_forward.1} parent=55 // pred_check_branch
          %350 = sbr.rel (%p348) target = $region60
        $region59: #{linear_probe_forward.1} parent=55 // pred_region
          %s351 = sand.u32 %s133, 1
          %s352 = scalar_lea.sflag [#allocation4], %s351
          %s353 = sand.u32 %s133, 1
          %s354 = smul.addr %s353, 8
          %s355 = scalar_lea.vmem [#allocation8], %s354
          %357 = dma.done %s352, 128
        $region60: #{linear_probe_forward.1} parent=55 // pred_fallthru
          _
      $region56: #{linear_probe_forward.1} parent=5 // pred_fallthru
        _
    $region6: #{linear_probe_forward.1} parent=1 // loop_footer
      %s20 = sadd.s32 1, %s16
    $region7: #{linear_probe_forward.1} parent=1 // loop_footer_branch
      %15 = sbr.rel target = $region3
    $region8: #{linear_probe_forward.1} parent=1 // loop_exit
      _
    %358 = vsyncpa [#allocation3], 1
    %s359 = scalar_lea.sflag [#allocation3], 1
    %360 = vsyncpa %s359, 1
    %361 = vsyncpa [#allocation6], 1
    %s362 = scalar_lea.sflag [#allocation6], 1
    %363 = vsyncpa %s362, 1
    %364 = vsyncpa [#allocation4], 1
    %s365 = scalar_lea.sflag [#allocation4], 1
    %366 = vsyncpa %s365, 1

</llo_original>
